<compile_context>
chip_gen: v5e
topology: v5e:2x2
jax: 0.10.0
libtpu: 0.0.40
codegen_flags: <defaults>
</compile_context>

<pallas_src>
import jax
import jax.numpy as jnp
import numpy as np
from jax.experimental import pallas as pl
from jax.experimental.pallas import tpu as pltpu

_LANES = 128
# ~2 MiB blocks: measured 85%+ of HBM roofline for copy-like kernels, and
# 4 buffers (in + out, double-buffered) * 2 MiB = 8 MiB VMEM fits every
# generation's default scoped VMEM (v5e 16 MiB, v6e 32 MiB, v7x 32 MiB).
_TARGET_BLOCK_BYTES = 2 * 1024 * 1024


def _identity_kernel(x_ref, o_ref):
    """Pure pass-through: copy the current input tile to the output tile."""
    o_ref[...] = x_ref[...]


def _sublane_multiple(dtype):
    """Dtype-aware sublane alignment: 8 for 4-byte, 16 for 2-byte, 32 for 1-byte."""
    itemsize = jnp.dtype(dtype).itemsize
    return 8 * max(1, 4 // itemsize)


def _round_up(a, m):
    return ((a + m - 1) // m) * m


def _identity_copy_2d(x2):
    """Lane-dense tiled identity copy of a (rows, 128) array via Pallas."""
    rows, cols = x2.shape
    itemsize = jnp.dtype(x2.dtype).itemsize
    sub = _sublane_multiple(x2.dtype)

    # Fixed block of ~_TARGET_BLOCK_BYTES, aligned to the dtype's sublane
    # multiple; never larger than the (sublane-rounded) array itself.
    target_rows = max(sub, (_TARGET_BLOCK_BYTES // (cols * itemsize)) // sub * sub)
    block_rows = min(target_rows, _round_up(rows, sub))
    grid = (pl.cdiv(rows, block_rows),)  # partial tail block handled by Pallas masking

    return pl.pallas_call(
        _identity_kernel,
        out_shape=jax.ShapeDtypeStruct((rows, cols), x2.dtype),
        grid_spec=pl.GridSpec(
            grid=grid,
            in_specs=[pl.BlockSpec((block_rows, cols), lambda i: (i, 0))],
            out_specs=pl.BlockSpec((block_rows, cols), lambda i: (i, 0)),
        ),
        # Output aliases the input buffer: no second HBM allocation when the
        # input is donatable (XLA inserts a defensive copy otherwise).
        input_output_aliases={0: 0},
        compiler_params=pltpu.CompilerParams(
            dimension_semantics=("parallel",),
        ),
    )(x2)


def shape_debugger_forward(x, msg="", force_pallas_copy=False):
    """Pallas equivalent of ShapeDebugger.forward: print the shape, return x unchanged."""
    # TODO(synk): shapes are static, so the f-string print is host-side; under jit
    # it fires only at trace time (PyTorch prints on every eager call).
    print(f" {msg}: {tuple(x.shape)}")

    if not force_pallas_copy:
        # forward() is a bit-exact identity: the fastest "kernel" is no kernel at
        # all — saves 2 * N * itemsize bytes of HBM traffic plus launch overhead.
        return x

    if x.size == 0:
        return x

    orig_shape = x.shape
    n = x.size

    if n % _LANES == 0:
        out2 = _identity_copy_2d(x.reshape(-1, _LANES))
        return out2.reshape(orig_shape)

    # Rare ragged path: pad to a (sublane * 128)-aligned length so the copy stays
    # lane-dense (unmasked full-width vst) instead of a 1-sublane (1, n) block.
    sub = _sublane_multiple(x.dtype)
    n_pad = _round_up(n, sub * _LANES)
    # TODO(synk): jnp.pad is itself an HBM copy; unavoidable without an HBM->HBM
    # DMA variant (memory_space=pl.ANY + make_async_copy).
    flat = jnp.pad(x.reshape(-1), (0, n_pad - n))
    out2 = _identity_copy_2d(flat.reshape(-1, _LANES))
    return out2.reshape(-1)[:n].reshape(orig_shape)


if __name__ == "__main__":
    key = jax.random.PRNGKey(0)
    # Arbitrary small input; ShapeDebugger accepts any shape/dtype and returns it as-is.
    x = jax.random.normal(key, (2, 4, 16, 16), jnp.float32)
    x_np = np.asarray(x)

    # Default fast path (review #1): identity elision, no pallas_call launched.
    y_fast = jax.block_until_ready(shape_debugger_forward(x, msg="debug"))
    np.testing.assert_array_equal(np.asarray(y_fast), x_np)

    # Explicit kernel path: lane-dense, aliased, tiled VMEM copy.
    y = jax.block_until_ready(
        shape_debugger_forward(x, msg="debug", force_pallas_copy=True))
    np.testing.assert_array_equal(np.asarray(y), x_np)
    assert y.shape == x.shape and y.dtype == x.dtype

    # Ragged path (n % 128 != 0): pad -> lane-dense copy -> slice.
    x_ragged = jax.random.normal(jax.random.PRNGKey(0), (3, 5, 7), jnp.float32)
    x_ragged_np = np.asarray(x_ragged)
    y_ragged = jax.block_until_ready(
        shape_debugger_forward(x_ragged, msg="ragged", force_pallas_copy=True))
    np.testing.assert_array_equal(np.asarray(y_ragged), x_ragged_np)
    assert y_ragged.shape == x_ragged.shape and y_ragged.dtype == x_ragged.dtype

    print("KERNEL_OK")
</pallas_src>

<mosaic_0001>
module attributes {stable_mosaic.version = 11 : i64} {
  func.func @_identity_kernel(%arg0: i32, %arg1: memref<16x128xf32, #tpu.memory_space<vmem>>, %arg2: memref<16x128xf32, #tpu.memory_space<vmem>>) attributes {dimension_semantics = [#tpu.dimension_semantics<parallel>], iteration_bounds = array<i64: 1>, scalar_prefetch = 0 : i64, scratch_operands = 0 : i64, tpu.core_type = #tpu.core_type<tc>, window_params = [{transform_indices = @transform_0, window_bounds = array<i64: 16, 128>}, {transform_indices = @transform_1, window_bounds = array<i64: 16, 128>}]} {
    %c0 = arith.constant 0 : index
    %c0_0 = arith.constant 0 : index
    %0 = vector.load %arg1[%c0, %c0_0] : memref<16x128xf32, #tpu.memory_space<vmem>>, vector<16x128xf32>
    %c0_1 = arith.constant 0 : index
    %c0_2 = arith.constant 0 : index
    %1 = vector.load %arg2[%c0_1, %c0_2] : memref<16x128xf32, #tpu.memory_space<vmem>>, vector<16x128xf32>
    tpu.vector_store %arg2[%c0_1, %c0_2], %0 {strides = array<i32>} : memref<16x128xf32, #tpu.memory_space<vmem>>, vector<16x128xf32>,
    return
  }
  func.func @transform_0(%arg0: i32) -> (i32, i32) {
    %c0_i32 = arith.constant 0 : i32
    %c0_i32_0 = arith.constant 0 : i32
    return %arg0, %c0_i32 : i32, i32
  }
  func.func @transform_1(%arg0: i32) -> (i32, i32) {
    %c0_i32 = arith.constant 0 : i32
    %c0_i32_0 = arith.constant 0 : i32
    return %arg0, %c0_i32 : i32, i32
  }
}

</mosaic_0001>

<llo_original>
// kernel: tpu_custom_call.1
$region0: #{tpu_custom_call.1}
  #allocation0 [shape = 'u32[]', space=smem, size = 0x4, offset = 0x4, fixed_abs, tag = 'smem constant byte address 0x4 - core index']
  #allocation1 [shape = 'u32[72,128]{1,0:T(1,128)}', space=vmem, size = 0x9000, scoped, tag = 'internal scratch']
  %s0 = inlined_call_operand.hbm [shape: f32[16,128], index: 0, kind: input, shape index: {}, may-alias: {0,1}]
  %s1 = inlined_call_operand.hbm [shape: f32[16,128], index: 1, kind: output, shape index: {}, may-alias: {0,1}]
  %s2 = sld [smem:[#allocation0]]
  $region18: #{tpu_custom_call.1} parent=0
    _
  %s4 = ssub.s32 1, %s2
  %s5 = scalar_select 0, %s4, %s2
  $region1: #{tpu_custom_call.1} parent=0
    #allocation2 [shape = 'u8[8192]{0}', space=vmem, size = 0x2000, scoped, tag = 'input window, operand 0, single buffered']
    #allocation3 [shape = 's32[1]{0}', space=sflag, size = 0x4, scoped, tag = 'scoped memory for tpu_custom_call.1']
    #allocation4 [shape = 's32[1]{0}', space=sflag, size = 0x4, scoped, tag = 'scoped memory for tpu_custom_call.1']
    #allocation5 [shape = 'u8[8192]{0}', space=vmem, size = 0x2000, scoped, tag = 'output window, operand 0, single buffered']
    %6 = vsyncpa [#allocation3], 0
    %7 = vsyncpa [#allocation4], 0
    // Predicated region
    $region2: #{tpu_custom_call.1} parent=1 // pred_check
      _
    $region3: #{tpu_custom_call.1} parent=1 // pred_check_branch
      %9 = sbr.rel (0) target = $region5
    $region4: #{tpu_custom_call.1} parent=1 // pred_region
      %11 = vsyncadd [#allocation3], 0
      %s12 = sshll.u32 %s0, 4
      %s13 = int_to_ptr.hbm [resolvable:$true] %s12
      %s14 = sshll.u32 [#allocation2], 4
      %s15 = int_to_ptr.vmem [resolvable:$true] %s14
      %20 = dma.hbm_to_vmem [thread:$0]  %s13, 256, %s15, [#allocation3], 128, 128, 8
    $region5: #{tpu_custom_call.1} parent=1 // pred_fallthru
      _
    // Predicated region
    $region6: #{tpu_custom_call.1} parent=1 // pred_check
      _
    $region7: #{tpu_custom_call.1} parent=1 // pred_check_branch
      %22 = sbr.rel (0) target = $region9
    $region8: #{tpu_custom_call.1} parent=1 // pred_region
      %24 = dma.done [#allocation3], 256
    $region9: #{tpu_custom_call.1} parent=1 // pred_fallthru
      _
    %v25 = vld [vmem:[#allocation2] sm:$0xff]
    %v26 = vld [vmem:[#allocation2 + $0x8] sm:$0xff]
    %27 = vst [vmem:[#allocation5] sm:$0xff] %v25
    %28 = vst [vmem:[#allocation5 + $0x8] sm:$0xff] %v26
    // Predicated region
    $region10: #{tpu_custom_call.1} parent=1 // pred_check
      _
    $region11: #{tpu_custom_call.1} parent=1 // pred_check_branch
      %30 = sbr.rel (0) target = $region13
    $region12: #{tpu_custom_call.1} parent=1 // pred_region
      %32 = vsyncadd [#allocation4], 0
      %s33 = sshll.u32 [#allocation5], 4
      %s34 = int_to_ptr.vmem [resolvable:$true] %s33
      %s35 = sshll.u32 %s1, 4
      %s36 = int_to_ptr.hbm [resolvable:$true] %s35
      %41 = dma.vmem_to_hbm [thread:$0]  %s34, 256, %s36, [#allocation4], 128, 128, 8
    $region13: #{tpu_custom_call.1} parent=1 // pred_fallthru
      _
    // Predicated region
    $region14: #{tpu_custom_call.1} parent=1 // pred_check
      _
    $region15: #{tpu_custom_call.1} parent=1 // pred_check_branch
      %43 = sbr.rel (0) target = $region17
    $region16: #{tpu_custom_call.1} parent=1 // pred_region
      %45 = dma.done [#allocation4], 256
    $region17: #{tpu_custom_call.1} parent=1 // pred_fallthru
      _
    %46 = vsyncpa [#allocation3], 1
    %47 = vsyncpa [#allocation4], 1

</llo_original>
